<compile_context>
chip_gen: v7x
topology: tpu7x:2x2x1
jax: 0.10.0
libtpu: 0.0.40
codegen_flags: <defaults>
</compile_context>

<pallas_src>
import jax
import jax.numpy as jnp
from jax.experimental import pallas as pl
from jax.experimental.pallas import tpu as pltpu


def _round_up(x, m):
    return ((x + m - 1) // m) * m


# -----------------------------------------------------------------------------
# Kernel
# -----------------------------------------------------------------------------
def dpg_mlp_kernel(x_ref, w1_ref, b1_ref, w2_ref, b2_ref, w3t_ref, b3t_ref,
                   ot_ref):
    """One batch tile of Linear -> ReLU -> Linear -> ReLU -> Linear.

    Weights are bf16 MXU operands; biases / accumulation / ReLU epilogue are
    f32.  The last layer is computed transposed (out^T = W3^T @ h2^T) so the
    tiny action dim rides sublanes and the batch rides lanes in the store.
    """
    x = x_ref[...].astype(jnp.bfloat16)                         # cast in-kernel
    h1 = jnp.dot(x, w1_ref[...], preferred_element_type=jnp.float32) + b1_ref[...]
    h1 = jnp.maximum(h1, 0.0)                                   # f32 ReLU
    h2 = jnp.dot(h1.astype(jnp.bfloat16), w2_ref[...],
                 preferred_element_type=jnp.float32) + b2_ref[...]
    h2 = jnp.maximum(h2, 0.0)                                   # f32 ReLU
    # (Ap8, H2p) x (tile, H2p) contracted on H2p -> (Ap8, tile); the h2
    # transpose rides the (otherwise idle) XLU slot.
    out_t = jax.lax.dot_general(
        w3t_ref[...], h2.astype(jnp.bfloat16),
        dimension_numbers=(((1,), (1,)), ((), ())),
        preferred_element_type=jnp.float32)
    ot_ref[...] = out_t + b3t_ref[...]                          # lane-dense store


# -----------------------------------------------------------------------------
# One-time parameter packing (keep off the per-forward hot path)
# -----------------------------------------------------------------------------
def prepare_dpg_params(params):
    """Pack (W1,b1,W2,b2,W3,b3) once: pad hidden dims to 128 lanes, cast
    weights to bf16 (MXU operands), keep biases f32, store W3 pre-transposed
    with the action dim padded to a multiple of 8 (sublane granularity).
    Zero padding is inert: padded bias lanes are 0 and padded weight rows are
    0, so padded activations stay exactly 0 through ReLU."""
    w1, b1, w2, b2, w3, b3 = params
    w1 = jnp.asarray(w1, jnp.float32)
    w2 = jnp.asarray(w2, jnp.float32)
    w3 = jnp.asarray(w3, jnp.float32)
    S, H1 = w1.shape
    H2 = w2.shape[1]
    A = w3.shape[1]
    H1p, H2p, Ap8 = _round_up(H1, 128), _round_up(H2, 128), _round_up(A, 8)

    def as_row(b):  # robust to both (out,) and (1, out) bias shapes
        return jnp.asarray(b, jnp.float32).reshape(1, -1)

    w1p = jnp.pad(w1, ((0, 0), (0, H1p - H1))).astype(jnp.bfloat16)
    b1p = jnp.pad(as_row(b1), ((0, 0), (0, H1p - H1)))
    w2p = jnp.pad(w2, ((0, H1p - H1), (0, H2p - H2))).astype(jnp.bfloat16)
    b2p = jnp.pad(as_row(b2), ((0, 0), (0, H2p - H2)))
    w3t = jnp.pad(w3.T, ((0, Ap8 - A), (0, H2p - H2))).astype(jnp.bfloat16)
    b3t = jnp.pad(as_row(b3).T, ((0, Ap8 - A), (0, 0)))

    return {
        "w1": w1p, "b1": b1p,
        "w2": w2p, "b2": b2p,
        "w3t": w3t, "b3t": b3t,
        "action_size": int(A),
    }


# -----------------------------------------------------------------------------
# Forward wrapper
# -----------------------------------------------------------------------------
def dpg_network_forward(state, packed, *, batch_tile=512):
    """state: (B, state_size) float32; packed: output of prepare_dpg_params."""
    w1p, b1p = packed["w1"], packed["b1"]
    w2p, b2p = packed["w2"], packed["b2"]
    w3t, b3t = packed["w3t"], packed["b3t"]
    A = packed["action_size"]

    B, S = state.shape
    assert S == w1p.shape[0], "state_size mismatch with packed params"
    H1p, H2p = w1p.shape[1], w2p.shape[1]
    Ap8 = w3t.shape[0]

    # The transposed output carries batch on the lane dim, so multi-step tiles
    # must be multiples of 128; small batches use a single full-extent step.
    batch_tile = max(128, _round_up(batch_tile, 128))
    B_pad = _round_up(B, 8)
    if B_pad > batch_tile:
        tile = batch_tile
    elif B_pad >= 256:
        # >=2 grid steps so both v7x TensorCores get work (harmless extra
        # ~0.35us step on single-TC v5e/v6e).
        tile = _round_up((B_pad + 1) // 2, 128)
    else:
        tile = B_pad                           # single grid step
    B_pad = _round_up(B_pad, tile)

    if B_pad != B:                             # skip the pad entirely when possible
        state = jnp.pad(state, ((0, B_pad - B), (0, 0)))

    grid = (B_pad // tile,)

    def resident(shape):                       # constant index_map -> stays in VMEM
        return pl.BlockSpec(shape, lambda i: (0,) * len(shape))

    # Only raise the scoped-VMEM limit if a huge tile would exceed v5e's
    # 16 MiB default (never triggers at the default tile sizes).
    w_bytes = sum(int(a.size) * a.dtype.itemsize
                  for a in (w1p, b1p, w2p, b2p, w3t, b3t))
    est_vmem = 2 * tile * S * 4 + 2 * Ap8 * tile * 4 + w_bytes + (1 << 20)
    vmem_limit = est_vmem if est_vmem > (14 << 20) else None

    out_t = pl.pallas_call(
        dpg_mlp_kernel,
        out_shape=jax.ShapeDtypeStruct((Ap8, B_pad), jnp.float32),
        grid_spec=pltpu.PrefetchScalarGridSpec(
            num_scalar_prefetch=0,
            grid=grid,
            in_specs=[
                pl.BlockSpec((tile, S), lambda i: (i, 0)),   # state tile
                resident((S, H1p)),                          # W1 (VMEM-resident)
                resident((1, H1p)),                          # b1
                resident((H1p, H2p)),                        # W2
                resident((1, H2p)),                          # b2
                resident((Ap8, H2p)),                        # W3^T
                resident((Ap8, 1)),                          # b3^T
            ],
            out_specs=pl.BlockSpec((Ap8, tile), lambda i: (0, i)),
        ),
        compiler_params=pltpu.CompilerParams(
            dimension_semantics=("parallel",),
            vmem_limit_bytes=vmem_limit,
        ),
    )(state, w1p, b1p, w2p, b2p, w3t, b3t)

    # Tiny (A, B) slice/transpose back to row-major (B, A).
    return out_t[:A, :B].T


# -----------------------------------------------------------------------------
# Reference / init helpers
# -----------------------------------------------------------------------------
def init_dpg_params(key, state_size, action_size, hidden=64):
    """nn.Linear-style U(-1/sqrt(fan_in), 1/sqrt(fan_in)) init, stored as (in, out)."""
    keys = jax.random.split(key, 6)

    def linear(kw, kb, fan_in, fan_out):
        bound = 1.0 / jnp.sqrt(jnp.float32(fan_in))
        w = jax.random.uniform(kw, (fan_in, fan_out), jnp.float32, -bound, bound)
        b = jax.random.uniform(kb, (fan_out,), jnp.float32, -bound, bound)
        return w, b

    w1, b1 = linear(keys[0], keys[1], state_size, hidden)
    w2, b2 = linear(keys[2], keys[3], hidden, hidden)
    w3, b3 = linear(keys[4], keys[5], hidden, action_size)
    return (w1, b1, w2, b2, w3, b3)


def dpg_network_reference(state, params):
    """Pure-JAX f32 reference for correctness check."""
    w1, b1, w2, b2, w3, b3 = params
    h = jnp.maximum(state @ w1 + b1, 0.0)
    h = jnp.maximum(h @ w2 + b2, 0.0)
    return h @ w3 + b3


if __name__ == "__main__":
    state_size = 16
    action_size = 4
    hidden = 64

    key = jax.random.PRNGKey(0)
    k_params, k_small, k_big = jax.random.split(key, 3)

    params = init_dpg_params(k_params, state_size, action_size, hidden=hidden)
    packed = prepare_dpg_params(params)          # one-time prep, off the hot path

    # Small batch: single grid step, no batch padding.
    state_small = jax.random.normal(k_small, (16, state_size), dtype=jnp.float32)
    out_small = jax.block_until_ready(dpg_network_forward(state_small, packed))
    ref_small = dpg_network_reference(state_small, params)
    assert out_small.shape == (16, action_size)
    # bf16 MXU operands (f32 accumulation) -> allow ~1e-2-level deviation.
    assert jnp.allclose(out_small, ref_small, atol=5e-2, rtol=5e-2), "small-batch mismatch"

    # Medium ragged batch: exercises batch padding + the >=2-step (v7x) path.
    state_big = jax.random.normal(k_big, (300, state_size), dtype=jnp.float32)
    out_big = jax.block_until_ready(dpg_network_forward(state_big, packed))
    ref_big = dpg_network_reference(state_big, params)
    assert out_big.shape == (300, action_size)
    assert jnp.allclose(out_big, ref_big, atol=5e-2, rtol=5e-2), "big-batch mismatch"

    print("KERNEL_OK")
</pallas_src>

<mosaic_0001>
module attributes {stable_mosaic.version = 11 : i64} {
  func.func @dpg_mlp_kernel(%arg0: i32, %arg1: memref<16x16xf32, #tpu.memory_space<vmem>>, %arg2: memref<16x128xbf16, #tpu.memory_space<vmem>>, %arg3: memref<1x128xf32, #tpu.memory_space<vmem>>, %arg4: memref<128x128xbf16, #tpu.memory_space<vmem>>, %arg5: memref<1x128xf32, #tpu.memory_space<vmem>>, %arg6: memref<8x128xbf16, #tpu.memory_space<vmem>>, %arg7: memref<8x1xf32, #tpu.memory_space<vmem>>, %arg8: memref<8x16xf32, #tpu.memory_space<vmem>>) attributes {dimension_semantics = [#tpu.dimension_semantics<parallel>], iteration_bounds = array<i64: 1>, scalar_prefetch = 0 : i64, scratch_operands = 0 : i64, tpu.core_type = #tpu.core_type<tc>, window_params = [{transform_indices = @transform_0, window_bounds = array<i64: 16, 16>}, {pipeline_mode = #tpu.pipeline_mode<synchronous>, transform_indices = @transform_1, window_bounds = array<i64: 16, 128>}, {pipeline_mode = #tpu.pipeline_mode<synchronous>, transform_indices = @transform_2, window_bounds = array<i64: 1, 128>}, {pipeline_mode = #tpu.pipeline_mode<synchronous>, transform_indices = @transform_3, window_bounds = array<i64: 128, 128>}, {pipeline_mode = #tpu.pipeline_mode<synchronous>, transform_indices = @transform_4, window_bounds = array<i64: 1, 128>}, {pipeline_mode = #tpu.pipeline_mode<synchronous>, transform_indices = @transform_5, window_bounds = array<i64: 8, 128>}, {pipeline_mode = #tpu.pipeline_mode<synchronous>, transform_indices = @transform_6, window_bounds = array<i64: 8, 1>}, {transform_indices = @transform_7, window_bounds = array<i64: 8, 16>}]} {
    %c0 = arith.constant 0 : index
    %c0_0 = arith.constant 0 : index
    %0 = vector.load %arg1[%c0, %c0_0] : memref<16x16xf32, #tpu.memory_space<vmem>>, vector<16x16xf32>
    %1 = arith.truncf %0 : vector<16x16xf32> to vector<16x16xbf16>
    %c0_1 = arith.constant 0 : index
    %c0_2 = arith.constant 0 : index
    %2 = vector.load %arg2[%c0_1, %c0_2] : memref<16x128xbf16, #tpu.memory_space<vmem>>, vector<16x128xbf16>
    %cst = arith.constant dense<0.000000e+00> : vector<16x128xf32>
    %3 = tpu.matmul %1, %2, %cst {dimension_numbers = #tpu.dot_dimension_numbers<[1], [0], [0], [1], [0, 0, 1, 1], [], []>} : vector<16x16xbf16>, vector<16x128xbf16>, vector<16x128xf32> -> vector<16x128xf32>
    %c0_3 = arith.constant 0 : index
    %c0_4 = arith.constant 0 : index
    %4 = vector.load %arg3[%c0_3, %c0_4] : memref<1x128xf32, #tpu.memory_space<vmem>>, vector<1x128xf32>
    %5 = vector.broadcast %4 : vector<1x128xf32> to vector<16x128xf32>
    %6 = arith.addf %3, %5 : vector<16x128xf32>
    %cst_5 = arith.constant 0.000000e+00 : f32
    %7 = vector.broadcast %cst_5 : f32 to vector<16x128xf32>
    %8 = arith.maximumf %6, %7 : vector<16x128xf32>
    %9 = arith.truncf %8 : vector<16x128xf32> to vector<16x128xbf16>
    %c0_6 = arith.constant 0 : index
    %c0_7 = arith.constant 0 : index
    %10 = vector.load %arg4[%c0_6, %c0_7] : memref<128x128xbf16, #tpu.memory_space<vmem>>, vector<128x128xbf16>
    %cst_8 = arith.constant dense<0.000000e+00> : vector<16x128xf32>
    %11 = tpu.matmul %9, %10, %cst_8 {dimension_numbers = #tpu.dot_dimension_numbers<[1], [0], [0], [1], [0, 0, 1, 1], [], []>} : vector<16x128xbf16>, vector<128x128xbf16>, vector<16x128xf32> -> vector<16x128xf32>
    %c0_9 = arith.constant 0 : index
    %c0_10 = arith.constant 0 : index
    %12 = vector.load %arg5[%c0_9, %c0_10] : memref<1x128xf32, #tpu.memory_space<vmem>>, vector<1x128xf32>
    %13 = vector.broadcast %12 : vector<1x128xf32> to vector<16x128xf32>
    %14 = arith.addf %11, %13 : vector<16x128xf32>
    %cst_11 = arith.constant 0.000000e+00 : f32
    %15 = vector.broadcast %cst_11 : f32 to vector<16x128xf32>
    %16 = arith.maximumf %14, %15 : vector<16x128xf32>
    %c0_12 = arith.constant 0 : index
    %c0_13 = arith.constant 0 : index
    %17 = vector.load %arg6[%c0_12, %c0_13] : memref<8x128xbf16, #tpu.memory_space<vmem>>, vector<8x128xbf16>
    %18 = arith.truncf %16 : vector<16x128xf32> to vector<16x128xbf16>
    %cst_14 = arith.constant dense<0.000000e+00> : vector<8x16xf32>
    %19 = tpu.matmul %17, %18, %cst_14 {dimension_numbers = #tpu.dot_dimension_numbers<[1], [1], [0], [0], [0, 0, 1, 0], [], []>} : vector<8x128xbf16>, vector<16x128xbf16>, vector<8x16xf32> -> vector<8x16xf32>
    %c0_15 = arith.constant 0 : index
    %c0_16 = arith.constant 0 : index
    %20 = vector.load %arg7[%c0_15, %c0_16] : memref<8x1xf32, #tpu.memory_space<vmem>>, vector<8x1xf32>
    %21 = vector.broadcast %20 : vector<8x1xf32> to vector<8x16xf32>
    %22 = arith.addf %19, %21 : vector<8x16xf32>
    %c0_17 = arith.constant 0 : index
    %c0_18 = arith.constant 0 : index
    %23 = vector.load %arg8[%c0_17, %c0_18] : memref<8x16xf32, #tpu.memory_space<vmem>>, vector<8x16xf32>
    tpu.vector_store %arg8[%c0_17, %c0_18], %22 {strides = array<i32>} : memref<8x16xf32, #tpu.memory_space<vmem>>, vector<8x16xf32>,
    return
  }
  func.func @transform_0(%arg0: i32) -> (i32, i32) {
    %c0_i32 = arith.constant 0 : i32
    %c0_i32_0 = arith.constant 0 : i32
    return %arg0, %c0_i32 : i32, i32
  }
  func.func @transform_1(%arg0: i32) -> (i32, i32) {
    %c0_i32 = arith.constant 0 : i32
    %c0_i32_0 = arith.constant 0 : i32
    %c0_i32_1 = arith.constant 0 : i32
    return %c0_i32, %c0_i32_0 : i32, i32
  }
  func.func @transform_2(%arg0: i32) -> (i32, i32) {
    %c0_i32 = arith.constant 0 : i32
    %c0_i32_0 = arith.constant 0 : i32
    %c0_i32_1 = arith.constant 0 : i32
    return %c0_i32, %c0_i32_0 : i32, i32
  }
  func.func @transform_3(%arg0: i32) -> (i32, i32) {
    %c0_i32 = arith.constant 0 : i32
    %c0_i32_0 = arith.constant 0 : i32
    %c0_i32_1 = arith.constant 0 : i32
    return %c0_i32, %c0_i32_0 : i32, i32
  }
  func.func @transform_4(%arg0: i32) -> (i32, i32) {
    %c0_i32 = arith.constant 0 : i32
    %c0_i32_0 = arith.constant 0 : i32
    %c0_i32_1 = arith.constant 0 : i32
    return %c0_i32, %c0_i32_0 : i32, i32
  }
  func.func @transform_5(%arg0: i32) -> (i32, i32) {
    %c0_i32 = arith.constant 0 : i32
    %c0_i32_0 = arith.constant 0 : i32
    %c0_i32_1 = arith.constant 0 : i32
    return %c0_i32, %c0_i32_0 : i32, i32
  }
  func.func @transform_6(%arg0: i32) -> (i32, i32) {
    %c0_i32 = arith.constant 0 : i32
    %c0_i32_0 = arith.constant 0 : i32
    %c0_i32_1 = arith.constant 0 : i32
    return %c0_i32, %c0_i32_0 : i32, i32
  }
  func.func @transform_7(%arg0: i32) -> (i32, i32) {
    %c0_i32 = arith.constant 0 : i32
    %c0_i32_0 = arith.constant 0 : i32
    return %c0_i32, %arg0 : i32, i32
  }
}

</mosaic_0001>

<llo_original>
// kernel: tpu_custom_call.1
$region0: #{tpu_custom_call.1}
  #allocation0 [shape = 'u32[]', space=smem, size = 0x4, offset = 0x4, fixed_abs, tag = 'smem constant byte address 0x4 - core index']
  #allocation1 [shape = 'u32[144,128]{1,0:T(1,128)}', space=vmem, size = 0x12000, scoped, tag = 'internal scratch']
  %s0 = inlined_call_operand.hbm [shape: f32[16,16], index: 0, kind: input, shape index: {}]
  %s1 = inlined_call_operand.vmem [shape: bf16[16,128], index: 1, kind: input, shape index: {}]
  %s2 = inlined_call_operand.vmem [shape: f32[1,128], index: 2, kind: input, shape index: {}]
  %s3 = inlined_call_operand.hbm [shape: bf16[128,128], index: 3, kind: input, shape index: {}]
  %s4 = inlined_call_operand.vmem [shape: f32[1,128], index: 4, kind: input, shape index: {}]
  %s5 = inlined_call_operand.vmem [shape: bf16[8,128], index: 5, kind: input, shape index: {}]
  %s6 = inlined_call_operand.vmem [shape: f32[8,1], index: 6, kind: input, shape index: {}]
  %s7 = inlined_call_operand.hbm [shape: f32[8,16], index: 7, kind: output, shape index: {}]
  %s8 = sld [smem:[#allocation0]]
  $region46: #{tpu_custom_call.1} parent=0
    _
  %s10 = ssub.s32 1, %s8
  %s11 = scalar_select 0, %s10, %s8
  $region1: #{tpu_custom_call.1} parent=0
    #allocation2 [shape = 'u8[8192]{0}', space=vmem, size = 0x2000, scoped, tag = 'input window, operand 0, single buffered']
    #allocation3 [shape = 's32[1]{0}', space=sflag, size = 0x4, scoped, tag = 'scoped memory for tpu_custom_call.1']
    #allocation4 [shape = 's32[1]{0}', space=sflag, size = 0x4, scoped, tag = 'scoped memory for tpu_custom_call.1']
    #allocation5 [shape = 'u8[32768]{0}', space=vmem, size = 0x8000, scoped, tag = 'input window, operand 3, single buffered']
    #allocation6 [shape = 's32[1]{0}', space=sflag, size = 0x4, scoped, tag = 'scoped memory for tpu_custom_call.1']
    #allocation7 [shape = 'u8[4096]{0}', space=vmem, size = 0x1000, scoped, tag = 'output window, operand 0, single buffered']
    %12 = vsyncpa [#allocation3], 0
    %13 = vsyncpa [#allocation6], 0
    %14 = vsyncpa [#allocation4], 0
    // Predicated region
    $region2: #{tpu_custom_call.1} parent=1 // pred_check
      _
    $region3: #{tpu_custom_call.1} parent=1 // pred_check_branch
      %16 = sbr.rel (0) target = $region5
    $region4: #{tpu_custom_call.1} parent=1 // pred_region
      %s18 = ssub.s32 256, 256
      %19 = vsyncadd [#allocation3], %s18
      %s20 = sshll.u32 [#allocation2], 4
      %s21 = int_to_ptr.vmem [resolvable:$true] %s20
      %26 = dma.hbm_to_vmem [thread:$0]  %s0, 256, %s21, [#allocation3], 128, 128, 8
    $region5: #{tpu_custom_call.1} parent=1 // pred_fallthru
      _
    // Predicated region
    $region6: #{tpu_custom_call.1} parent=1 // pred_check
      _
    $region7: #{tpu_custom_call.1} parent=1 // pred_check_branch
      %28 = sbr.rel (0) target = $region9
    $region8: #{tpu_custom_call.1} parent=1 // pred_region
      _
    $region9: #{tpu_custom_call.1} parent=1 // pred_fallthru
      _
    // Predicated region
    $region10: #{tpu_custom_call.1} parent=1 // pred_check
      _
    $region11: #{tpu_custom_call.1} parent=1 // pred_check_branch
      %30 = sbr.rel (0) target = $region13
    $region12: #{tpu_custom_call.1} parent=1 // pred_region
      _
    $region13: #{tpu_custom_call.1} parent=1 // pred_fallthru
      _
    // Predicated region
    $region14: #{tpu_custom_call.1} parent=1 // pred_check
      _
    $region15: #{tpu_custom_call.1} parent=1 // pred_check_branch
      %32 = sbr.rel (0) target = $region17
    $region16: #{tpu_custom_call.1} parent=1 // pred_region
      %s34 = ssub.s32 1024, 1024
      %35 = vsyncadd [#allocation6], %s34
      %s36 = sshll.u32 [#allocation5], 4
      %s37 = int_to_ptr.vmem [resolvable:$true] %s36
      %42 = dma.hbm_to_vmem [thread:$0]  %s3, 1024, %s37, [#allocation6], 64, 64, 4
    $region17: #{tpu_custom_call.1} parent=1 // pred_fallthru
      _
    // Predicated region
    $region18: #{tpu_custom_call.1} parent=1 // pred_check
      _
    $region19: #{tpu_custom_call.1} parent=1 // pred_check_branch
      %44 = sbr.rel (0) target = $region21
    $region20: #{tpu_custom_call.1} parent=1 // pred_region
      _
    $region21: #{tpu_custom_call.1} parent=1 // pred_fallthru
      _
    // Predicated region
    $region22: #{tpu_custom_call.1} parent=1 // pred_check
      _
    $region23: #{tpu_custom_call.1} parent=1 // pred_check_branch
      %46 = sbr.rel (0) target = $region25
    $region24: #{tpu_custom_call.1} parent=1 // pred_region
      _
    $region25: #{tpu_custom_call.1} parent=1 // pred_fallthru
      _
    // Predicated region
    $region26: #{tpu_custom_call.1} parent=1 // pred_check
      _
    $region27: #{tpu_custom_call.1} parent=1 // pred_check_branch
      %48 = sbr.rel (0) target = $region29
    $region28: #{tpu_custom_call.1} parent=1 // pred_region
      _
    $region29: #{tpu_custom_call.1} parent=1 // pred_fallthru
      _
    // Predicated region
    $region30: #{tpu_custom_call.1} parent=1 // pred_check
      _
    $region31: #{tpu_custom_call.1} parent=1 // pred_check_branch
      %50 = sbr.rel (0) target = $region33
    $region32: #{tpu_custom_call.1} parent=1 // pred_region
      %51 = dma.done [#allocation3], 256
    $region33: #{tpu_custom_call.1} parent=1 // pred_fallthru
      _
    // Predicated region
    $region34: #{tpu_custom_call.1} parent=1 // pred_check
      _
    $region35: #{tpu_custom_call.1} parent=1 // pred_check_branch
      %53 = sbr.rel (0) target = $region37
    $region36: #{tpu_custom_call.1} parent=1 // pred_region
      %54 = dma.done [#allocation6], 1024
    $region37: #{tpu_custom_call.1} parent=1 // pred_fallthru
      _
    %v56 = vld [vmem:[#allocation2] sm:$0xff]
    %v57 = vld [vmem:[#allocation2 + $0x8] sm:$0xff]
    %v58 = vpack.c.bf16 %v57, %v56
    %v59 = vld [vmem:[%s1] sm:$0xf]
    %v60 = vld [vmem:[%s1 + $0x4] sm:$0xf]
    %v61 = vld [vmem:[%s2] sm:$0x1]
    %v63 = vlaneseq
    %v64 = vshrl.u32 %v63, 7
    %v65 = vsub.s32 0, %v64
    %v66 = vrot.slane %v61, %v65
    %v70 = vunpack.c.l.b16 %v59
    %v71 = vunpack.c.l.b16 %v60
    %v72 = vpack.c.b16 %v71, %v70
    %vm74 = vcmask 130048
    %v76 = vsel %vm74, %v58, 0
    %78 = vmatprep.subr.bf16.mxu0 0
    %79 = vmatpush1.bf16.msra.mxu0 %v72
    %80 = vmatprep.subr.bf16.mxu0 0
    %81 = vmatpush1.bf16.msra.mxu0 0
    %82 = vmatprep.subr.bf16.mxu0 0
    %83 = vmatpush1.bf16.msra.mxu0 0
    %84 = vmatprep.subr.bf16.mxu0 0
    %85 = vmatpush1.bf16.msra.mxu0 0
    %86 = vmatprep.subr.bf16.mxu0 0
    %87 = vmatpush1.bf16.msra.mxu0 0
    %88 = vmatprep.subr.bf16.mxu0 0
    %89 = vmatpush1.bf16.msra.mxu0 0
    %90 = vmatprep.subr.bf16.mxu0 0
    %91 = vmatpush1.bf16.msra.mxu0 0
    %92 = vmatprep.subr.bf16.mxu0 0
    %93 = vmatpush1.bf16.msra.mxu0 0
    %94 = vmatprep.subr.bf16.mxu0 0
    %95 = vmatpush1.bf16.msra.mxu0 0
    %96 = vmatprep.subr.bf16.mxu0 0
    %97 = vmatpush1.bf16.msra.mxu0 0
    %98 = vmatprep.subr.bf16.mxu0 0
    %99 = vmatpush1.bf16.msra.mxu0 0
    %100 = vmatprep.subr.bf16.mxu0 0
    %101 = vmatpush1.bf16.msra.mxu0 0
    %102 = vmatprep.subr.bf16.mxu0 0
    %103 = vmatpush1.bf16.msra.mxu0 0
    %104 = vmatprep.subr.bf16.mxu0 0
    %105 = vmatpush1.bf16.msra.mxu0 0
    %106 = vmatprep.subr.bf16.mxu0 0
    %107 = vmatpush1.bf16.msra.mxu0 0
    %108 = vmatprep.subr.bf16.mxu0 0
    %109 = vmatpush1.bf16.msra.mxu0 0
    %110 = vmatprep.mubr.bf16.mxu0 0
    %111 = vmatmul.mubr.bf16.gmra.mrb[0].mxu0 %v76
    %v112 = vpop.f32.mrb[0].mxu0
    %v113 = vadd.f32 %v66, %v112
    %v114 = vpop.f32.mrb[0].mxu0
    %v115 = vpop.f32.mrb[0].mxu0
    %v116 = vadd.f32 %v66, %v115
    %v117 = vpop.f32.mrb[0].mxu0
    %118 = vdwg.mxu0
    %v119 = vmax.f32 %v113, 0.0
    %v120 = vmax.f32 %v116, 0.0
    %v121 = vpack.c.bf16 %v120, %v119
    %v122 = vld [vmem:[#allocation5] sm:$0xf]
    %v123 = vld [vmem:[#allocation5 + $0x4] sm:$0xf]
    %v124 = vld [vmem:[#allocation5 + $0x8] sm:$0xf]
    %v125 = vld [vmem:[#allocation5 + $0xc] sm:$0xf]
    %v126 = vld [vmem:[#allocation5 + $0x10] sm:$0xf]
    %v127 = vld [vmem:[#allocation5 + $0x14] sm:$0xf]
    %v128 = vld [vmem:[#allocation5 + $0x18] sm:$0xf]
    %v129 = vld [vmem:[#allocation5 + $0x1c] sm:$0xf]
    %v130 = vld [vmem:[#allocation5 + $0x20] sm:$0xf]
    %v131 = vld [vmem:[#allocation5 + $0x24] sm:$0xf]
    %v132 = vld [vmem:[#allocation5 + $0x28] sm:$0xf]
    %v133 = vld [vmem:[#allocation5 + $0x2c] sm:$0xf]
    %v134 = vld [vmem:[#allocation5 + $0x30] sm:$0xf]
    %v135 = vld [vmem:[#allocation5 + $0x34] sm:$0xf]
    %v136 = vld [vmem:[#allocation5 + $0x38] sm:$0xf]
    %v137 = vld [vmem:[#allocation5 + $0x3c] sm:$0xf]
    %v138 = vld [vmem:[%s4] sm:$0x1]
    %v140 = vlaneseq
    %v141 = vshrl.u32 %v140, 7
    %v142 = vsub.s32 0, %v141
    %v143 = vrot.slane %v138, %v142
    %v161 = vunpack.c.l.b16 %v122
    %v162 = vunpack.c.l.b16 %v123
    %v163 = vunpack.c.l.b16 %v124
    %v164 = vunpack.c.l.b16 %v125
    %v165 = vunpack.c.l.b16 %v126
    %v166 = vunpack.c.l.b16 %v127
    %v167 = vunpack.c.l.b16 %v128
    %v168 = vunpack.c.l.b16 %v129
    %v169 = vunpack.c.l.b16 %v130
    %v170 = vunpack.c.l.b16 %v131
    %v171 = vunpack.c.l.b16 %v132
    %v172 = vunpack.c.l.b16 %v133
    %v173 = vunpack.c.l.b16 %v134
    %v174 = vunpack.c.l.b16 %v135
    %v175 = vunpack.c.l.b16 %v136
    %v176 = vunpack.c.l.b16 %v137
    %v177 = vpack.c.b16 %v162, %v161
    %v178 = vpack.c.b16 %v164, %v163
    %v179 = vpack.c.b16 %v166, %v165
    %v180 = vpack.c.b16 %v168, %v167
    %v181 = vpack.c.b16 %v170, %v169
    %v182 = vpack.c.b16 %v172, %v171
    %v183 = vpack.c.b16 %v174, %v173
    %v184 = vpack.c.b16 %v176, %v175
    %193 = vmatprep.subr.bf16.mxu0 0
    %194 = vmatpush1.bf16.msra.mxu0 %v177
    %195 = vmatprep.subr.bf16.mxu0 0
    %196 = vmatpush1.bf16.msra.mxu0 %v178
    %197 = vmatprep.subr.bf16.mxu0 0
    %198 = vmatpush1.bf16.msra.mxu0 %v179
    %199 = vmatprep.subr.bf16.mxu0 0
    %200 = vmatpush1.bf16.msra.mxu0 %v180
    %201 = vmatprep.subr.bf16.mxu0 0
    %202 = vmatpush1.bf16.msra.mxu0 %v181
    %203 = vmatprep.subr.bf16.mxu0 0
    %204 = vmatpush1.bf16.msra.mxu0 %v182
    %205 = vmatprep.subr.bf16.mxu0 0
    %206 = vmatpush1.bf16.msra.mxu0 %v183
    %207 = vmatprep.subr.bf16.mxu0 0
    %208 = vmatpush1.bf16.msra.mxu0 %v184
    %209 = vmatprep.subr.bf16.mxu0 0
    %210 = vmatpush1.bf16.msra.mxu0 0
    %211 = vmatprep.subr.bf16.mxu0 0
    %212 = vmatpush1.bf16.msra.mxu0 0
    %213 = vmatprep.subr.bf16.mxu0 0
    %214 = vmatpush1.bf16.msra.mxu0 0
    %215 = vmatprep.subr.bf16.mxu0 0
    %216 = vmatpush1.bf16.msra.mxu0 0
    %217 = vmatprep.subr.bf16.mxu0 0
    %218 = vmatpush1.bf16.msra.mxu0 0
    %219 = vmatprep.subr.bf16.mxu0 0
    %220 = vmatpush1.bf16.msra.mxu0 0
    %221 = vmatprep.subr.bf16.mxu0 0
    %222 = vmatpush1.bf16.msra.mxu0 0
    %223 = vmatprep.subr.bf16.mxu0 0
    %224 = vmatpush1.bf16.msra.mxu0 0
    %225 = vmatprep.mubr.bf16.mxu0 0
    %226 = vmatmul.mubr.bf16.gmra.mrb[0].mxu0 %v121
    %v227 = vpop.f32.mrb[0].mxu0
    %v228 = vadd.f32 %v143, %v227
    %v229 = vpop.f32.mrb[0].mxu0
    %v230 = vpop.f32.mrb[0].mxu0
    %v231 = vadd.f32 %v143, %v230
    %v232 = vpop.f32.mrb[0].mxu0
    %233 = vdwg.mxu0
    %v234 = vmax.f32 %v228, 0.0
    %v235 = vmax.f32 %v231, 0.0
    %v236 = vld [vmem:[%s5] sm:$0xf]
    %v237 = vpack.c.bf16 %v235, %v234
    %v238 = vld [vmem:[%s6] sm:$0xff]
    %240 = vset.pattern.permute.xlu0 0
    %241 = vperm.xlu0 %240, %v238
    %v242 = vpop.permute.xlu0 %241
    %244 = vmatprep.subr.bf16.mxu0 0
    %245 = vmatpush1.bf16.xpose.msra.mxu0 %v237
    %246 = vmatprep.subr.bf16.mxu0 0
    %247 = vmatpush1.bf16.xpose.msra.mxu0 0
    %248 = vmatprep.subr.bf16.mxu0 0
    %249 = vmatpush1.bf16.xpose.msra.mxu0 0
    %250 = vmatprep.subr.bf16.mxu0 0
    %251 = vmatpush1.bf16.xpose.msra.mxu0 0
    %252 = vmatprep.subr.bf16.mxu0 0
    %253 = vmatpush1.bf16.xpose.msra.mxu0 0
    %254 = vmatprep.subr.bf16.mxu0 0
    %255 = vmatpush1.bf16.xpose.msra.mxu0 0
    %256 = vmatprep.subr.bf16.mxu0 0
    %257 = vmatpush1.bf16.xpose.msra.mxu0 0
    %258 = vmatprep.subr.bf16.mxu0 0
    %259 = vmatpush1.bf16.xpose.msra.mxu0 0
    %260 = vmatprep.subr.bf16.mxu0 0
    %261 = vmatpush1.bf16.xpose.msra.mxu0 0
    %262 = vmatprep.subr.bf16.mxu0 0
    %263 = vmatpush1.bf16.xpose.msra.mxu0 0
    %264 = vmatprep.subr.bf16.mxu0 0
    %265 = vmatpush1.bf16.xpose.msra.mxu0 0
    %266 = vmatprep.subr.bf16.mxu0 0
    %267 = vmatpush1.bf16.xpose.msra.mxu0 0
    %268 = vmatprep.subr.bf16.mxu0 0
    %269 = vmatpush1.bf16.xpose.msra.mxu0 0
    %270 = vmatprep.subr.bf16.mxu0 0
    %271 = vmatpush1.bf16.xpose.msra.mxu0 0
    %272 = vmatprep.subr.bf16.mxu0 0
    %273 = vmatpush1.bf16.xpose.msra.mxu0 0
    %274 = vmatprep.subr.bf16.mxu0 0
    %275 = vmatpush1.bf16.xpose.msra.mxu0 0
    %276 = vmatprep.mubr.bf16.mxu0 0
    %277 = vmatmul.mubr.bf16.gmra.mrb[0].mxu0 %v236
    %v278 = vpop.f32.mrb[0].mxu0
    %v279 = vadd.f32 %v242, %v278
    %v280 = vpop.f32.mrb[0].mxu0
    %v281 = vpop.f32.mrb[0].mxu0
    %v282 = vpop.f32.mrb[0].mxu0
    %283 = vdwg.mxu0
    %284 = vst.msk [vmem:[#allocation7] sm:$0xff] %vm74, %v279
    // Predicated region
    $region38: #{tpu_custom_call.1} parent=1 // pred_check
      _
    $region39: #{tpu_custom_call.1} parent=1 // pred_check_branch
      %286 = sbr.rel (0) target = $region41
    $region40: #{tpu_custom_call.1} parent=1 // pred_region
      %s288 = ssub.s32 128, 128
      %289 = vsyncadd [#allocation4], %s288
      %s291 = sshll.u32 [#allocation7], 4
      %s292 = int_to_ptr.vmem [resolvable:$true] %s291
      %294 = dma.vmem_to_hbm [thread:$0]  %s292, 128, %s7, [#allocation4]
    $region41: #{tpu_custom_call.1} parent=1 // pred_fallthru
      _
    // Predicated region
    $region42: #{tpu_custom_call.1} parent=1 // pred_check
      _
    $region43: #{tpu_custom_call.1} parent=1 // pred_check_branch
      %296 = sbr.rel (0) target = $region45
    $region44: #{tpu_custom_call.1} parent=1 // pred_region
      %297 = dma.done [#allocation4], 128
    $region45: #{tpu_custom_call.1} parent=1 // pred_fallthru
      _
    %298 = vsyncpa [#allocation3], 1
    %299 = vsyncpa [#allocation6], 1
    %300 = vsyncpa [#allocation4], 1

</llo_original>
